<compile_context>
chip_gen: v7x
topology: tpu7x:2x2x1
jax: 0.10.0
libtpu: 0.0.40
codegen_flags: <defaults>
</compile_context>

<pallas_src>
import jax
import jax.numpy as jnp
from jax.experimental import pallas as pl
from jax.experimental.pallas import tpu as pltpu

N = 128              # number of graph nodes
F = 64               # input feature dim
H = 32               # hidden_dim
BN_EPS = 1e-5        # torch BatchNorm1d default
DROPOUT_P = 0.2      # module default
DROP_THRESHOLD = int(DROPOUT_P * (1 << 32))   # keep iff uint32 bits >= threshold
KEEP_SCALE = 1.0 / (1.0 - DROPOUT_P)


# ---------------------------------------------------------------------------
# Fused kernel: GCN (online ++ target) -> predictor (Linear -> BN -> PReLU ->
#               2x Dropout).  Single block, lane-dense (N, 4H) output slab.
# ---------------------------------------------------------------------------
def bgrl_fused_kernel(a_ref, x_ref, wenc_ref, benc_ref, aenc_ref,
                      pw_ref, pb_ref, gamma_ref, beta_ref, rbits_ref,
                      apred_ref, o_ref):
    # --- encoder: z = A_hat @ (X @ [W_on | W_tg]) + [b_on | b_tg] ----------
    xw = jnp.dot(x_ref[...], wenc_ref[...],
                 preferred_element_type=jnp.float32)                  # (N, 2H)
    z = jnp.dot(a_ref[...], xw,
                preferred_element_type=jnp.float32) + benc_ref[...]   # (N, 2H)
    h_cat = jnp.where(z >= 0, z, aenc_ref[...] * z)                   # PReLU, (N, 2H)

    # --- predictor on the online view (shared by both augmented views) ----
    h_on = h_cat[:, :H]                                               # (N, H)
    zp = jnp.dot(h_on, pw_ref[...],
                 preferred_element_type=jnp.float32) + pb_ref[...]    # (N, H)
    # BatchNorm1d training semantics: per-feature mean / biased var over nodes.
    mean = jnp.mean(zp, axis=0, keepdims=True)
    var = jnp.mean(jnp.square(zp - mean), axis=0, keepdims=True)
    zn = (zp - mean) * jax.lax.rsqrt(var + BN_EPS) * gamma_ref[...] + beta_ref[...]
    alpha_p = apred_ref[0]                                            # SMEM scalar
    p = jnp.where(zn >= 0, zn, alpha_p * zn)                          # (N, H)

    # Dropout (train mode): two independent masks (view 1 | view 2),
    # integer-space compare on precomputed uniform uint32 bits.
    keep = rbits_ref[...] >= jnp.uint32(DROP_THRESHOLD)               # (N, 2H)
    p2 = jnp.concatenate([p, p], axis=1)                              # (N, 2H)
    preds = jnp.where(keep, p2 * KEEP_SCALE, jnp.float32(0.0))

    # Lane-dense output slab: [h_online | h_target | h_pred1 | h_pred2].
    o_ref[...] = jnp.concatenate([h_cat, preds], axis=1)              # (N, 4H)


def bgrl_forward_fused(a_hat, x, w_cat, b_cat, alpha_cat,
                       pred_w, pred_b, gamma, beta, rbits, alpha_pred):
    n, f = x.shape
    h2 = w_cat.shape[1]
    h = h2 // 2
    return pl.pallas_call(
        bgrl_fused_kernel,
        out_shape=jax.ShapeDtypeStruct((n, 4 * h), jnp.float32),
        grid_spec=pltpu.PrefetchScalarGridSpec(
            num_scalar_prefetch=0,
            grid=(1,),
            in_specs=[
                pl.BlockSpec((n, n), lambda i: (0, 0)),       # A_hat
                pl.BlockSpec((n, f), lambda i: (0, 0)),       # X
                pl.BlockSpec((f, h2), lambda i: (0, 0)),      # [W_online | W_target]
                pl.BlockSpec((1, h2), lambda i: (0, 0)),      # [b_online | b_target]
                pl.BlockSpec((1, h2), lambda i: (0, 0)),      # PReLU alpha row (enc)
                pl.BlockSpec((h, h), lambda i: (0, 0)),       # predictor W
                pl.BlockSpec((1, h), lambda i: (0, 0)),       # predictor b
                pl.BlockSpec((1, h), lambda i: (0, 0)),       # BN gamma
                pl.BlockSpec((1, h), lambda i: (0, 0)),       # BN beta
                pl.BlockSpec((n, 2 * h), lambda i: (0, 0)),   # dropout random bits
                pl.BlockSpec(memory_space=pltpu.MemorySpace.SMEM),  # pred PReLU alpha
            ],
            out_specs=pl.BlockSpec((n, 4 * h), lambda i: (0, 0)),
        ),
        compiler_params=pltpu.CompilerParams(
            dimension_semantics=("arbitrary",)),
    )(a_hat, x, w_cat, b_cat, alpha_cat, pred_w, pred_b, gamma, beta,
      rbits, alpha_pred)


# ---------------------------------------------------------------------------
# Glue (plain JAX): graph densification / normalization, parameter setup.
# ---------------------------------------------------------------------------
def build_normalized_adj(edge_index, n):
    a = jnp.zeros((n, n), jnp.float32)
    a = a.at[edge_index[0], edge_index[1]].set(1.0)
    a = a.at[edge_index[1], edge_index[0]].set(1.0)       # undirected
    a = jnp.where(jnp.eye(n, dtype=bool), 1.0, a)          # self loops (diag == 1)
    d_inv_sqrt = jax.lax.rsqrt(jnp.sum(a, axis=1))
    return a * d_inv_sqrt[:, None] * d_inv_sqrt[None, :]


def init_params(key):
    k1, k2, k3, k4 = jax.random.split(key, 4)
    lim_enc = 1.0 / jnp.sqrt(F)
    lim_pred = 1.0 / jnp.sqrt(H)
    online = {
        "w": jax.random.uniform(k1, (F, H), jnp.float32, -lim_enc, lim_enc),
        "b": jax.random.uniform(k2, (1, H), jnp.float32, -lim_enc, lim_enc),
        "alpha": jnp.full((1, 1), 0.25, jnp.float32),   # PReLU default init
    }
    return {
        "online": online,
        # target encoder = deepcopy of online encoder on first use
        "target": {k: v for k, v in online.items()},
        "pred_w": jax.random.uniform(k3, (H, H), jnp.float32, -lim_pred, lim_pred),
        "pred_b": jax.random.uniform(k4, (1, H), jnp.float32, -lim_pred, lim_pred),
        "bn_gamma": jnp.ones((1, H), jnp.float32),
        "bn_beta": jnp.zeros((1, H), jnp.float32),
        "pred_alpha": jnp.full((1,), 0.25, jnp.float32),   # scalar, lives in SMEM
    }


def encoder_forward(params, x, edge_index, edge_weight=None, rng_key=None):
    # TODO(synk): augmentor is an external callable pair in BGRL; identity
    # augmentations used here, so x1 == x2 and the GCN is computed once.
    # TODO(synk): online_encoder is an external multi-layer GConv; 1-layer GCN
    # stand-in used here.
    n = x.shape[0]
    a_hat = build_normalized_adj(edge_index, n)

    on, tg = params["online"], params["target"]
    # Lane-concatenate online and target encoder params -> one fused pass.
    w_cat = jnp.concatenate([on["w"], tg["w"]], axis=1)                 # (F, 2H)
    b_cat = jnp.concatenate([on["b"], tg["b"]], axis=1)                 # (1, 2H)
    alpha_cat = jnp.concatenate([jnp.broadcast_to(on["alpha"], (1, H)),
                                 jnp.broadcast_to(tg["alpha"], (1, H))],
                                axis=1)                                 # (1, 2H)

    if rng_key is None:
        rng_key = jax.random.PRNGKey(0)
    # TODO(synk): torch's CPU/CUDA dropout RNG stream is not reproducible here;
    # uniform uint32 bits are drawn with jax.random and compared in int space.
    rbits = jax.random.bits(rng_key, (n, 2 * H), dtype=jnp.uint32)      # view1|view2

    out = bgrl_forward_fused(a_hat, x, w_cat, b_cat, alpha_cat,
                             params["pred_w"], params["pred_b"],
                             params["bn_gamma"], params["bn_beta"],
                             rbits, params["pred_alpha"])

    h_online = out[:, 0 * H:1 * H]
    h_target = out[:, 1 * H:2 * H]
    h1_pred = out[:, 2 * H:3 * H]
    h2_pred = out[:, 3 * H:4 * H]

    # x1 == x2 (identity augmentation) => online/target outputs shared by views.
    h1, h2 = h_online, h_online
    h1_target, h2_target = h_target, h_target
    return h1, h2, h1_pred, h2_pred, h1_target, h2_target


if __name__ == "__main__":
    key = jax.random.PRNGKey(0)
    kx, kp, kd = jax.random.split(key, 3)
    x = jax.random.normal(kx, (N, F), jnp.float32)
    src = jnp.arange(N, dtype=jnp.int32)
    dst = (src + 1) % N
    edge_index = jnp.stack([src, dst], axis=0)        # (2, N) ring graph

    params = init_params(kp)
    outs = encoder_forward(params, x, edge_index, rng_key=kd)
    for o in outs:
        jax.block_until_ready(o)

    h1, h2, h1_pred, h2_pred, h1_target, h2_target = outs
    assert all(o.shape == (N, H) for o in outs)
    assert all(bool(jnp.all(jnp.isfinite(o))) for o in outs)
    print("KERNEL_OK")
</pallas_src>

<mosaic_0001>
module attributes {stable_mosaic.version = 11 : i64} {
  func.func @bgrl_fused_kernel(%arg0: i32, %arg1: memref<128x128xf32, #tpu.memory_space<vmem>>, %arg2: memref<128x64xf32, #tpu.memory_space<vmem>>, %arg3: memref<64x64xf32, #tpu.memory_space<vmem>>, %arg4: memref<1x64xf32, #tpu.memory_space<vmem>>, %arg5: memref<1x64xf32, #tpu.memory_space<vmem>>, %arg6: memref<32x32xf32, #tpu.memory_space<vmem>>, %arg7: memref<1x32xf32, #tpu.memory_space<vmem>>, %arg8: memref<1x32xf32, #tpu.memory_space<vmem>>, %arg9: memref<1x32xf32, #tpu.memory_space<vmem>>, %arg10: memref<128x64xi32, #tpu.memory_space<vmem>>, %arg11: memref<1xf32, #tpu.memory_space<smem>>, %arg12: memref<128x128xf32, #tpu.memory_space<vmem>>) attributes {dimension_semantics = [#tpu.dimension_semantics<arbitrary>], iteration_bounds = array<i64: 1>, scalar_prefetch = 0 : i64, scratch_operands = 0 : i64, tpu.core_type = #tpu.core_type<tc>, window_params = [{pipeline_mode = #tpu.pipeline_mode<synchronous>, transform_indices = @transform_0, window_bounds = array<i64: 128, 128>}, {pipeline_mode = #tpu.pipeline_mode<synchronous>, transform_indices = @transform_1, window_bounds = array<i64: 128, 64>}, {pipeline_mode = #tpu.pipeline_mode<synchronous>, transform_indices = @transform_2, window_bounds = array<i64: 64, 64>}, {pipeline_mode = #tpu.pipeline_mode<synchronous>, transform_indices = @transform_3, window_bounds = array<i64: 1, 64>}, {pipeline_mode = #tpu.pipeline_mode<synchronous>, transform_indices = @transform_4, window_bounds = array<i64: 1, 64>}, {pipeline_mode = #tpu.pipeline_mode<synchronous>, transform_indices = @transform_5, window_bounds = array<i64: 32, 32>}, {pipeline_mode = #tpu.pipeline_mode<synchronous>, transform_indices = @transform_6, window_bounds = array<i64: 1, 32>}, {pipeline_mode = #tpu.pipeline_mode<synchronous>, transform_indices = @transform_7, window_bounds = array<i64: 1, 32>}, {pipeline_mode = #tpu.pipeline_mode<synchronous>, transform_indices = @transform_8, window_bounds = array<i64: 1, 32>}, {pipeline_mode = #tpu.pipeline_mode<synchronous>, transform_indices = @transform_9, window_bounds = array<i64: 128, 64>}, {transform_indices = @transform_10, window_bounds = array<i64: 1>}, {pipeline_mode = #tpu.pipeline_mode<synchronous>, transform_indices = @transform_11, window_bounds = array<i64: 128, 128>}]} {
    %c0 = arith.constant 0 : index
    %c0_0 = arith.constant 0 : index
    %0 = vector.load %arg2[%c0, %c0_0] : memref<128x64xf32, #tpu.memory_space<vmem>>, vector<128x64xf32>
    %c0_1 = arith.constant 0 : index
    %c0_2 = arith.constant 0 : index
    %1 = vector.load %arg3[%c0_1, %c0_2] : memref<64x64xf32, #tpu.memory_space<vmem>>, vector<64x64xf32>
    %cst = arith.constant dense<0.000000e+00> : vector<128x64xf32>
    %2 = tpu.matmul %0, %1, %cst {dimension_numbers = #tpu.dot_dimension_numbers<[1], [0], [0], [1], [0, 0, 1, 1], [], []>} : vector<128x64xf32>, vector<64x64xf32>, vector<128x64xf32> -> vector<128x64xf32>
    %c0_3 = arith.constant 0 : index
    %c0_4 = arith.constant 0 : index
    %3 = vector.load %arg1[%c0_3, %c0_4] : memref<128x128xf32, #tpu.memory_space<vmem>>, vector<128x128xf32>
    %cst_5 = arith.constant dense<0.000000e+00> : vector<128x64xf32>
    %4 = tpu.matmul %3, %2, %cst_5 {dimension_numbers = #tpu.dot_dimension_numbers<[1], [0], [0], [1], [0, 0, 1, 1], [], []>} : vector<128x128xf32>, vector<128x64xf32>, vector<128x64xf32> -> vector<128x64xf32>
    %c0_6 = arith.constant 0 : index
    %c0_7 = arith.constant 0 : index
    %5 = vector.load %arg4[%c0_6, %c0_7] : memref<1x64xf32, #tpu.memory_space<vmem>>, vector<1x64xf32>
    %6 = vector.broadcast %5 : vector<1x64xf32> to vector<128x64xf32>
    %7 = arith.addf %4, %6 : vector<128x64xf32>
    %cst_8 = arith.constant 0.000000e+00 : f32
    %8 = vector.broadcast %cst_8 : f32 to vector<128x64xf32>
    %9 = arith.cmpf oge, %7, %8 : vector<128x64xf32>
    %c0_9 = arith.constant 0 : index
    %c0_10 = arith.constant 0 : index
    %10 = vector.load %arg5[%c0_9, %c0_10] : memref<1x64xf32, #tpu.memory_space<vmem>>, vector<1x64xf32>
    %11 = vector.broadcast %10 : vector<1x64xf32> to vector<128x64xf32>
    %12 = arith.mulf %11, %7 : vector<128x64xf32>
    %13 = arith.select %9, %7, %12 : vector<128x64xi1>, vector<128x64xf32>
    %14 = vector.extract_strided_slice %13 {offsets = [0, 0], sizes = [128, 32], strides = [1, 1]} : vector<128x64xf32> to vector<128x32xf32>
    %c0_11 = arith.constant 0 : index
    %c0_12 = arith.constant 0 : index
    %15 = vector.load %arg6[%c0_11, %c0_12] : memref<32x32xf32, #tpu.memory_space<vmem>>, vector<32x32xf32>
    %cst_13 = arith.constant dense<0.000000e+00> : vector<128x32xf32>
    %16 = tpu.matmul %14, %15, %cst_13 {dimension_numbers = #tpu.dot_dimension_numbers<[1], [0], [0], [1], [0, 0, 1, 1], [], []>} : vector<128x32xf32>, vector<32x32xf32>, vector<128x32xf32> -> vector<128x32xf32>
    %c0_14 = arith.constant 0 : index
    %c0_15 = arith.constant 0 : index
    %17 = vector.load %arg7[%c0_14, %c0_15] : memref<1x32xf32, #tpu.memory_space<vmem>>, vector<1x32xf32>
    %18 = vector.broadcast %17 : vector<1x32xf32> to vector<128x32xf32>
    %19 = arith.addf %16, %18 : vector<128x32xf32>
    %cst_16 = arith.constant dense<0.000000e+00> : vector<32xf32>
    %20 = vector.multi_reduction <add>, %19, %cst_16 [0] : vector<128x32xf32> to vector<32xf32>
    %21 = vector.shape_cast %20 : vector<32xf32> to vector<1x32xf32>
    %cst_17 = arith.constant 1.280000e+02 : f32
    %22 = vector.broadcast %cst_17 : f32 to vector<1x32xf32>
    %23 = arith.divf %21, %22 : vector<1x32xf32>
    %24 = vector.broadcast %23 : vector<1x32xf32> to vector<128x32xf32>
    %25 = arith.subf %19, %24 : vector<128x32xf32>
    %26 = arith.mulf %25, %25 : vector<128x32xf32>
    %cst_18 = arith.constant dense<0.000000e+00> : vector<32xf32>
    %27 = vector.multi_reduction <add>, %26, %cst_18 [0] : vector<128x32xf32> to vector<32xf32>
    %28 = vector.shape_cast %27 : vector<32xf32> to vector<1x32xf32>
    %cst_19 = arith.constant 1.280000e+02 : f32
    %29 = vector.broadcast %cst_19 : f32 to vector<1x32xf32>
    %30 = arith.divf %28, %29 : vector<1x32xf32>
    %31 = vector.broadcast %23 : vector<1x32xf32> to vector<128x32xf32>
    %32 = arith.subf %19, %31 : vector<128x32xf32>
    %cst_20 = arith.constant 9.99999974E-6 : f32
    %33 = vector.broadcast %cst_20 : f32 to vector<1x32xf32>
    %34 = arith.addf %30, %33 : vector<1x32xf32>
    %35 = math.rsqrt %34 : vector<1x32xf32>
    %36 = vector.broadcast %35 : vector<1x32xf32> to vector<128x32xf32>
    %37 = arith.mulf %32, %36 : vector<128x32xf32>
    %c0_21 = arith.constant 0 : index
    %c0_22 = arith.constant 0 : index
    %38 = vector.load %arg8[%c0_21, %c0_22] : memref<1x32xf32, #tpu.memory_space<vmem>>, vector<1x32xf32>
    %39 = vector.broadcast %38 : vector<1x32xf32> to vector<128x32xf32>
    %40 = arith.mulf %37, %39 : vector<128x32xf32>
    %c0_23 = arith.constant 0 : index
    %c0_24 = arith.constant 0 : index
    %41 = vector.load %arg9[%c0_23, %c0_24] : memref<1x32xf32, #tpu.memory_space<vmem>>, vector<1x32xf32>
    %42 = vector.broadcast %41 : vector<1x32xf32> to vector<128x32xf32>
    %43 = arith.addf %40, %42 : vector<128x32xf32>
    %c0_25 = arith.constant 0 : index
    %44 = memref.load %arg11[%c0_25] : memref<1xf32, #tpu.memory_space<smem>>
    %cst_26 = arith.constant 0.000000e+00 : f32
    %45 = vector.broadcast %cst_26 : f32 to vector<128x32xf32>
    %46 = arith.cmpf oge, %43, %45 : vector<128x32xf32>
    %47 = vector.broadcast %44 : f32 to vector<128x32xf32>
    %48 = arith.mulf %47, %43 : vector<128x32xf32>
    %49 = arith.select %46, %43, %48 : vector<128x32xi1>, vector<128x32xf32>
    %c0_27 = arith.constant 0 : index
    %c0_28 = arith.constant 0 : index
    %50 = vector.load %arg10[%c0_27, %c0_28] : memref<128x64xi32, #tpu.memory_space<vmem>>, vector<128x64xi32>
    %c858993459_i32 = arith.constant 858993459 : i32
    %51 = vector.broadcast %c858993459_i32 : i32 to vector<128x64xi32>
    %52 = arith.cmpi uge, %50, %51 : vector<128x64xi32>
    %53 = tpu.concatenate %49, %49 in 1 : vector<128x32xf32>, vector<128x32xf32> -> vector<128x64xf32>
    %cst_29 = arith.constant 1.250000e+00 : f32
    %54 = vector.broadcast %cst_29 : f32 to vector<128x64xf32>
    %55 = arith.mulf %53, %54 : vector<128x64xf32>
    %cst_30 = arith.constant 0.000000e+00 : f32
    %56 = vector.broadcast %cst_30 : f32 to vector<128x64xf32>
    %57 = arith.select %52, %55, %56 : vector<128x64xi1>, vector<128x64xf32>
    %58 = tpu.concatenate %13, %57 in 1 : vector<128x64xf32>, vector<128x64xf32> -> vector<128x128xf32>
    %c0_31 = arith.constant 0 : index
    %c0_32 = arith.constant 0 : index
    %59 = vector.load %arg12[%c0_31, %c0_32] : memref<128x128xf32, #tpu.memory_space<vmem>>, vector<128x128xf32>
    tpu.vector_store %arg12[%c0_31, %c0_32], %58 {strides = array<i32>} : memref<128x128xf32, #tpu.memory_space<vmem>>, vector<128x128xf32>,
    return
  }
  func.func @transform_0(%arg0: i32) -> (i32, i32) {
    %c0_i32 = arith.constant 0 : i32
    %c0_i32_0 = arith.constant 0 : i32
    %c0_i32_1 = arith.constant 0 : i32
    return %c0_i32, %c0_i32_0 : i32, i32
  }
  func.func @transform_1(%arg0: i32) -> (i32, i32) {
    %c0_i32 = arith.constant 0 : i32
    %c0_i32_0 = arith.constant 0 : i32
    %c0_i32_1 = arith.constant 0 : i32
    return %c0_i32, %c0_i32_0 : i32, i32
  }
  func.func @transform_2(%arg0: i32) -> (i32, i32) {
    %c0_i32 = arith.constant 0 : i32
    %c0_i32_0 = arith.constant 0 : i32
    %c0_i32_1 = arith.constant 0 : i32
    return %c0_i32, %c0_i32_0 : i32, i32
  }
  func.func @transform_3(%arg0: i32) -> (i32, i32) {
    %c0_i32 = arith.constant 0 : i32
    %c0_i32_0 = arith.constant 0 : i32
    %c0_i32_1 = arith.constant 0 : i32
    return %c0_i32, %c0_i32_0 : i32, i32
  }
  func.func @transform_4(%arg0: i32) -> (i32, i32) {
    %c0_i32 = arith.constant 0 : i32
    %c0_i32_0 = arith.constant 0 : i32
    %c0_i32_1 = arith.constant 0 : i32
    return %c0_i32, %c0_i32_0 : i32, i32
  }
  func.func @transform_5(%arg0: i32) -> (i32, i32) {
    %c0_i32 = arith.constant 0 : i32
    %c0_i32_0 = arith.constant 0 : i32
    %c0_i32_1 = arith.constant 0 : i32
    return %c0_i32, %c0_i32_0 : i32, i32
  }
  func.func @transform_6(%arg0: i32) -> (i32, i32) {
    %c0_i32 = arith.constant 0 : i32
    %c0_i32_0 = arith.constant 0 : i32
    %c0_i32_1 = arith.constant 0 : i32
    return %c0_i32, %c0_i32_0 : i32, i32
  }
  func.func @transform_7(%arg0: i32) -> (i32, i32) {
    %c0_i32 = arith.constant 0 : i32
    %c0_i32_0 = arith.constant 0 : i32
    %c0_i32_1 = arith.constant 0 : i32
    return %c0_i32, %c0_i32_0 : i32, i32
  }
  func.func @transform_8(%arg0: i32) -> (i32, i32) {
    %c0_i32 = arith.constant 0 : i32
    %c0_i32_0 = arith.constant 0 : i32
    %c0_i32_1 = arith.constant 0 : i32
    return %c0_i32, %c0_i32_0 : i32, i32
  }
  func.func @transform_9(%arg0: i32) -> (i32, i32) {
    %c0_i32 = arith.constant 0 : i32
    %c0_i32_0 = arith.constant 0 : i32
    %c0_i32_1 = arith.constant 0 : i32
    return %c0_i32, %c0_i32_0 : i32, i32
  }
  func.func @transform_10(%arg0: i32) -> i32 {
    %c0_i32 = arith.constant 0 : i32
    %c0_i32_0 = arith.constant 0 : i32
    return %c0_i32 : i32
  }
  func.func @transform_11(%arg0: i32) -> (i32, i32) {
    %c0_i32 = arith.constant 0 : i32
    %c0_i32_0 = arith.constant 0 : i32
    %c0_i32_1 = arith.constant 0 : i32
    return %c0_i32, %c0_i32_0 : i32, i32
  }
}

</mosaic_0001>

<llo_original>
// kernel: tpu_custom_call.1
$region0: #{tpu_custom_call.1}
  #allocation0 [shape = 'u32[]', space=smem, size = 0x4, offset = 0x4, fixed_abs, tag = 'smem constant byte address 0x4 - core index']
  #allocation1 [shape = 'u32[144,128]{1,0:T(1,128)}', space=vmem, size = 0x12000, scoped, tag = 'internal scratch']
  #allocation2 [shape = 'f32[1]{0:T(128)S(6)}', space=smem, size = 0x200, scoped, tag = 'scoped memory for tpu_custom_call.1']
  %s0 = inlined_call_operand.vmem [shape: f32[128,128], index: 0, kind: input, shape index: {}]
  %s1 = inlined_call_operand.vmem [shape: f32[128,64], index: 1, kind: input, shape index: {}]
  %s2 = inlined_call_operand.vmem [shape: f32[64,64], index: 2, kind: input, shape index: {}]
  %s3 = inlined_call_operand.vmem [shape: f32[1,64], index: 3, kind: input, shape index: {}]
  %s4 = inlined_call_operand.vmem [shape: f32[1,64], index: 4, kind: input, shape index: {}]
  %s5 = inlined_call_operand.vmem [shape: f32[32,32], index: 5, kind: input, shape index: {}]
  %s6 = inlined_call_operand.vmem [shape: f32[1,32], index: 6, kind: input, shape index: {}]
  %s7 = inlined_call_operand.vmem [shape: f32[1,32], index: 7, kind: input, shape index: {}]
  %s8 = inlined_call_operand.vmem [shape: f32[1,32], index: 8, kind: input, shape index: {}]
  %s9 = inlined_call_operand.vmem [shape: u32[128,64], index: 9, kind: input, shape index: {}]
  %s10 = inlined_call_operand.<no memory space> [shape: f32[1], index: 10, kind: input, shape index: {}]
  %s11 = inlined_call_operand.hbm [shape: f32[128,128], index: 11, kind: output, shape index: {}]
  %s12 = sld [smem:[#allocation0]]
  $region54: #{tpu_custom_call.1} parent=0
    _
  %s14 = ssub.s32 1, %s12
  %s15 = scalar_select 0, %s14, %s12
  %16 = sst [smem:[#allocation2]] %s10
  $region1: #{tpu_custom_call.1} parent=0
    #allocation3 [shape = 'u8[65536]{0}', space=vmem, size = 0x10000, scoped, tag = 'output window, operand 0, single buffered']
    #allocation4 [shape = 's32[1]{0}', space=sflag, size = 0x4, scoped, tag = 'scoped memory for tpu_custom_call.1']
    %17 = vsyncpa [#allocation4], 0
    // Predicated region
    $region2: #{tpu_custom_call.1} parent=1 // pred_check
      _
    $region3: #{tpu_custom_call.1} parent=1 // pred_check_branch
      %19 = sbr.rel (0) target = $region5
    $region4: #{tpu_custom_call.1} parent=1 // pred_region
      _
    $region5: #{tpu_custom_call.1} parent=1 // pred_fallthru
      _
    // Predicated region
    $region6: #{tpu_custom_call.1} parent=1 // pred_check
      _
    $region7: #{tpu_custom_call.1} parent=1 // pred_check_branch
      %21 = sbr.rel (0) target = $region9
    $region8: #{tpu_custom_call.1} parent=1 // pred_region
      _
    $region9: #{tpu_custom_call.1} parent=1 // pred_fallthru
      _
    // Predicated region
    $region10: #{tpu_custom_call.1} parent=1 // pred_check
      _
    $region11: #{tpu_custom_call.1} parent=1 // pred_check_branch
      %23 = sbr.rel (0) target = $region13
    $region12: #{tpu_custom_call.1} parent=1 // pred_region
      _
    $region13: #{tpu_custom_call.1} parent=1 // pred_fallthru
      _
    // Predicated region
    $region14: #{tpu_custom_call.1} parent=1 // pred_check
      _
    $region15: #{tpu_custom_call.1} parent=1 // pred_check_branch
      %25 = sbr.rel (0) target = $region17
    $region16: #{tpu_custom_call.1} parent=1 // pred_region
      _
    $region17: #{tpu_custom_call.1} parent=1 // pred_fallthru
      _
    // Predicated region
    $region18: #{tpu_custom_call.1} parent=1 // pred_check
      _
    $region19: #{tpu_custom_call.1} parent=1 // pred_check_branch
      %27 = sbr.rel (0) target = $region21
    $region20: #{tpu_custom_call.1} parent=1 // pred_region
      _
    $region21: #{tpu_custom_call.1} parent=1 // pred_fallthru
      _
    // Predicated region
    $region22: #{tpu_custom_call.1} parent=1 // pred_check
      _
    $region23: #{tpu_custom_call.1} parent=1 // pred_check_branch
      %29 = sbr.rel (0) target = $region25
    $region24: #{tpu_custom_call.1} parent=1 // pred_region
      _
    $region25: #{tpu_custom_call.1} parent=1 // pred_fallthru
      _
    // Predicated region
    $region26: #{tpu_custom_call.1} parent=1 // pred_check
      _
    $region27: #{tpu_custom_call.1} parent=1 // pred_check_branch
      %31 = sbr.rel (0) target = $region29
    $region28: #{tpu_custom_call.1} parent=1 // pred_region
      _
    $region29: #{tpu_custom_call.1} parent=1 // pred_fallthru
      _
    // Predicated region
    $region30: #{tpu_custom_call.1} parent=1 // pred_check
      _
    $region31: #{tpu_custom_call.1} parent=1 // pred_check_branch
      %33 = sbr.rel (0) target = $region33
    $region32: #{tpu_custom_call.1} parent=1 // pred_region
      _
    $region33: #{tpu_custom_call.1} parent=1 // pred_fallthru
      _
    // Predicated region
    $region34: #{tpu_custom_call.1} parent=1 // pred_check
      _
    $region35: #{tpu_custom_call.1} parent=1 // pred_check_branch
      %35 = sbr.rel (0) target = $region37
    $region36: #{tpu_custom_call.1} parent=1 // pred_region
      _
    $region37: #{tpu_custom_call.1} parent=1 // pred_fallthru
      _
    // Predicated region
    $region38: #{tpu_custom_call.1} parent=1 // pred_check
      _
    $region39: #{tpu_custom_call.1} parent=1 // pred_check_branch
      %37 = sbr.rel (0) target = $region41
    $region40: #{tpu_custom_call.1} parent=1 // pred_region
      _
    $region41: #{tpu_custom_call.1} parent=1 // pred_fallthru
      _
    // Predicated region
    $region42: #{tpu_custom_call.1} parent=1 // pred_check
      _
    $region43: #{tpu_custom_call.1} parent=1 // pred_check_branch
      %39 = sbr.rel (0) target = $region45
    $region44: #{tpu_custom_call.1} parent=1 // pred_region
      _
    $region45: #{tpu_custom_call.1} parent=1 // pred_fallthru
      _
    %v40 = vld [vmem:[%s1] sm:$0xff]
    %v41 = vld [vmem:[%s1 + $0x8] sm:$0xff]
    %v42 = vld [vmem:[%s1 + $0x10] sm:$0xff]
    %v43 = vld [vmem:[%s1 + $0x18] sm:$0xff]
    %v44 = vld [vmem:[%s1 + $0x20] sm:$0xff]
    %v45 = vld [vmem:[%s1 + $0x28] sm:$0xff]
    %v46 = vld [vmem:[%s1 + $0x30] sm:$0xff]
    %v47 = vld [vmem:[%s1 + $0x38] sm:$0xff]
    %v48 = vld [vmem:[%s1 + $0x40] sm:$0xff]
    %v49 = vld [vmem:[%s1 + $0x48] sm:$0xff]
    %v50 = vld [vmem:[%s1 + $0x50] sm:$0xff]
    %v51 = vld [vmem:[%s1 + $0x58] sm:$0xff]
    %v52 = vld [vmem:[%s1 + $0x60] sm:$0xff]
    %v53 = vld [vmem:[%s1 + $0x68] sm:$0xff]
    %v54 = vld [vmem:[%s1 + $0x70] sm:$0xff]
    %v55 = vld [vmem:[%s1 + $0x78] sm:$0xff]
    %v56 = vld [vmem:[%s2] sm:$0xff]
    %v57 = vld [vmem:[%s2 + $0x8] sm:$0xff]
    %v58 = vld [vmem:[%s2 + $0x10] sm:$0xff]
    %v59 = vld [vmem:[%s2 + $0x18] sm:$0xff]
    %v60 = vld [vmem:[%s2 + $0x20] sm:$0xff]
    %v61 = vld [vmem:[%s2 + $0x28] sm:$0xff]
    %v62 = vld [vmem:[%s2 + $0x30] sm:$0xff]
    %v63 = vld [vmem:[%s2 + $0x38] sm:$0xff]
    %vm64 = vcmask 523264
    %v66 = vsel %vm64, %v40, 0
    %v69 = vsel %vm64, %v41, 0
    %v72 = vsel %vm64, %v42, 0
    %v75 = vsel %vm64, %v43, 0
    %v78 = vsel %vm64, %v44, 0
    %v81 = vsel %vm64, %v45, 0
    %v84 = vsel %vm64, %v46, 0
    %v87 = vsel %vm64, %v47, 0
    %v90 = vsel %vm64, %v48, 0
    %v93 = vsel %vm64, %v49, 0
    %v96 = vsel %vm64, %v50, 0
    %v99 = vsel %vm64, %v51, 0
    %v102 = vsel %vm64, %v52, 0
    %v105 = vsel %vm64, %v53, 0
    %v108 = vsel %vm64, %v54, 0
    %v111 = vsel %vm64, %v55, 0
    %113 = vmatprep.subr.mxu0 0.0
    %114 = vmatpush1.msra.mxu0 %v56
    %115 = vmatprep.subr.mxu0 0.0
    %116 = vmatpush1.msra.mxu0 %v57
    %117 = vmatprep.subr.mxu0 0.0
    %118 = vmatpush1.msra.mxu0 %v58
    %119 = vmatprep.subr.mxu0 0.0
    %120 = vmatpush1.msra.mxu0 %v59
    %121 = vmatprep.subr.mxu0 0.0
    %122 = vmatpush1.msra.mxu0 %v60
    %123 = vmatprep.subr.mxu0 0.0
    %124 = vmatpush1.msra.mxu0 %v61
    %125 = vmatprep.subr.mxu0 0.0
    %126 = vmatpush1.msra.mxu0 %v62
    %127 = vmatprep.subr.mxu0 0.0
    %128 = vmatpush1.msra.mxu0 %v63
    %129 = vmatprep.subr.mxu0 0.0
    %130 = vmatpush1.msra.mxu0 0.0
    %131 = vmatprep.subr.mxu0 0.0
    %132 = vmatpush1.msra.mxu0 0.0
    %133 = vmatprep.subr.mxu0 0.0
    %134 = vmatpush1.msra.mxu0 0.0
    %135 = vmatprep.subr.mxu0 0.0
    %136 = vmatpush1.msra.mxu0 0.0
    %137 = vmatprep.subr.mxu0 0.0
    %138 = vmatpush1.msra.mxu0 0.0
    %139 = vmatprep.subr.mxu0 0.0
    %140 = vmatpush1.msra.mxu0 0.0
    %141 = vmatprep.subr.mxu0 0.0
    %142 = vmatpush1.msra.mxu0 0.0
    %143 = vmatprep.subr.mxu0 0.0
    %144 = vmatpush1.msra.mxu0 0.0
    %145 = vmatprep.subr.mxu0 0.0
    %146 = vmatpush1.msra.mxu0 0.0
    %147 = vmatprep.subr.mxu0 0.0
    %148 = vmatpush1.msra.mxu0 0.0
    %149 = vmatprep.subr.mxu0 0.0
    %150 = vmatpush1.msra.mxu0 0.0
    %151 = vmatprep.subr.mxu0 0.0
    %152 = vmatpush1.msra.mxu0 0.0
    %153 = vmatprep.subr.mxu0 0.0
    %154 = vmatpush1.msra.mxu0 0.0
    %155 = vmatprep.subr.mxu0 0.0
    %156 = vmatpush1.msra.mxu0 0.0
    %157 = vmatprep.subr.mxu0 0.0
    %158 = vmatpush1.msra.mxu0 0.0
    %159 = vmatprep.subr.mxu0 0.0
    %160 = vmatpush1.msra.mxu0 0.0
    %161 = vmatprep.subr.mxu0 0.0
    %162 = vmatpush1.msra.mxu0 0.0
    %163 = vmatprep.subr.mxu0 0.0
    %164 = vmatpush1.msra.mxu0 0.0
    %165 = vmatprep.subr.mxu0 0.0
    %166 = vmatpush1.msra.mxu0 0.0
    %167 = vmatprep.subr.mxu0 0.0
    %168 = vmatpush1.msra.mxu0 0.0
    %169 = vmatprep.subr.mxu0 0.0
    %170 = vmatpush1.msra.mxu0 0.0
    %171 = vmatprep.subr.mxu0 0.0
    %172 = vmatpush1.msra.mxu0 0.0
    %173 = vmatprep.subr.mxu0 0.0
    %174 = vmatpush1.msra.mxu0 0.0
    %175 = vmatprep.subr.mxu0 0.0
    %176 = vmatpush1.msra.mxu0 0.0
    %177 = vmatprep.mubr.f32.mxu0 0.0
    %178 = vmatmul.mubr.f32.gmra.mrb[0].mxu0 %v66
    %v179 = vpop.f32.mrb[0].mxu0
    %v180 = vadd.f32 0.0, %v179
    %v181 = vpop.f32.mrb[0].mxu0
    %182 = vmatprep.mubr.f32.mxu0 0.0
    %183 = vmatmul.mubr.f32.gmra.mrb[0].mxu0 %v69
    %v184 = vpop.f32.mrb[0].mxu0
    %v185 = vadd.f32 0.0, %v184
    %v186 = vpop.f32.mrb[0].mxu0
    %187 = vmatprep.mubr.f32.mxu0 0.0
    %188 = vmatmul.mubr.f32.gmra.mrb[0].mxu0 %v72
    %v189 = vpop.f32.mrb[0].mxu0
    %v190 = vadd.f32 0.0, %v189
    %v191 = vpop.f32.mrb[0].mxu0
    %192 = vmatprep.mubr.f32.mxu0 0.0
    %193 = vmatmul.mubr.f32.gmra.mrb[0].mxu0 %v75
    %v194 = vpop.f32.mrb[0].mxu0
    %v195 = vadd.f32 0.0, %v194
    %v196 = vpop.f32.mrb[0].mxu0
    %197 = vmatprep.mubr.f32.mxu0 0.0
    %198 = vmatmul.mubr.f32.gmra.mrb[0].mxu0 %v78
    %v199 = vpop.f32.mrb[0].mxu0
    %v200 = vadd.f32 0.0, %v199
    %v201 = vpop.f32.mrb[0].mxu0
    %202 = vmatprep.mubr.f32.mxu0 0.0
    %203 = vmatmul.mubr.f32.gmra.mrb[0].mxu0 %v81
    %v204 = vpop.f32.mrb[0].mxu0
    %v205 = vadd.f32 0.0, %v204
    %v206 = vpop.f32.mrb[0].mxu0
    %207 = vmatprep.mubr.f32.mxu0 0.0
    %208 = vmatmul.mubr.f32.gmra.mrb[0].mxu0 %v84
    %v209 = vpop.f32.mrb[0].mxu0
    %v210 = vadd.f32 0.0, %v209
    %v211 = vpop.f32.mrb[0].mxu0
    %212 = vmatprep.mubr.f32.mxu0 0.0
    %213 = vmatmul.mubr.f32.gmra.mrb[0].mxu0 %v87
    %v214 = vpop.f32.mrb[0].mxu0
    %v215 = vadd.f32 0.0, %v214
    %v216 = vpop.f32.mrb[0].mxu0
    %217 = vmatprep.mubr.f32.mxu0 0.0
    %218 = vmatmul.mubr.f32.gmra.mrb[0].mxu0 %v90
    %v219 = vpop.f32.mrb[0].mxu0
    %v220 = vadd.f32 0.0, %v219
    %v221 = vpop.f32.mrb[0].mxu0
    %222 = vmatprep.mubr.f32.mxu0 0.0
    %223 = vmatmul.mubr.f32.gmra.mrb[0].mxu0 %v93
    %v224 = vpop.f32.mrb[0].mxu0
    %v225 = vadd.f32 0.0, %v224
    %v226 = vpop.f32.mrb[0].mxu0
    %227 = vmatprep.mubr.f32.mxu0 0.0
    %228 = vmatmul.mubr.f32.gmra.mrb[0].mxu0 %v96
    %v229 = vpop.f32.mrb[0].mxu0
    %v230 = vadd.f32 0.0, %v229
    %v231 = vpop.f32.mrb[0].mxu0
    %232 = vmatprep.mubr.f32.mxu0 0.0
    %233 = vmatmul.mubr.f32.gmra.mrb[0].mxu0 %v99
    %v234 = vpop.f32.mrb[0].mxu0
    %v235 = vadd.f32 0.0, %v234
    %v236 = vpop.f32.mrb[0].mxu0
    %237 = vmatprep.mubr.f32.mxu0 0.0
    %238 = vmatmul.mubr.f32.gmra.mrb[0].mxu0 %v102
    %v239 = vpop.f32.mrb[0].mxu0
    %v240 = vadd.f32 0.0, %v239
    %v241 = vpop.f32.mrb[0].mxu0
    %242 = vmatprep.mubr.f32.mxu0 0.0
    %243 = vmatmul.mubr.f32.gmra.mrb[0].mxu0 %v105
    %v244 = vpop.f32.mrb[0].mxu0
    %v245 = vadd.f32 0.0, %v244
    %v246 = vpop.f32.mrb[0].mxu0
    %247 = vmatprep.mubr.f32.mxu0 0.0
    %248 = vmatmul.mubr.f32.gmra.mrb[0].mxu0 %v108
    %v249 = vpop.f32.mrb[0].mxu0
    %v250 = vadd.f32 0.0, %v249
    %v251 = vpop.f32.mrb[0].mxu0
    %252 = vmatprep.mubr.f32.mxu0 0.0
    %253 = vmatmul.mubr.f32.gmra.mrb[0].mxu0 %v111
    %v254 = vpop.f32.mrb[0].mxu0
    %v255 = vadd.f32 0.0, %v254
    %v256 = vpop.f32.mrb[0].mxu0
    %257 = vdwg.mxu0
    %v258 = vld [vmem:[%s0] sm:$0xff]
    %v259 = vld [vmem:[%s0 + $0x8] sm:$0xff]
    %v260 = vld [vmem:[%s0 + $0x10] sm:$0xff]
    %v261 = vld [vmem:[%s0 + $0x18] sm:$0xff]
    %v262 = vld [vmem:[%s0 + $0x20] sm:$0xff]
    %v263 = vld [vmem:[%s0 + $0x28] sm:$0xff]
    %v264 = vld [vmem:[%s0 + $0x30] sm:$0xff]
    %v265 = vld [vmem:[%s0 + $0x38] sm:$0xff]
    %v266 = vld [vmem:[%s0 + $0x40] sm:$0xff]
    %v267 = vld [vmem:[%s0 + $0x48] sm:$0xff]
    %v268 = vld [vmem:[%s0 + $0x50] sm:$0xff]
    %v269 = vld [vmem:[%s0 + $0x58] sm:$0xff]
    %v270 = vld [vmem:[%s0 + $0x60] sm:$0xff]
    %v271 = vld [vmem:[%s0 + $0x68] sm:$0xff]
    %v272 = vld [vmem:[%s0 + $0x70] sm:$0xff]
    %v273 = vld [vmem:[%s0 + $0x78] sm:$0xff]
    %v274 = vld [vmem:[%s3] sm:$0x1]
    %v276 = vlaneseq
    %v277 = vshrl.u32 %v276, 7
    %v278 = vsub.s32 0, %v277
    %v279 = vrot.slane %v274, %v278
    %281 = vmatprep.subr.mxu0 0.0
    %282 = vmatpush1.msra.mxu0 %v180
    %283 = vmatprep.subr.mxu0 0.0
    %284 = vmatpush1.msra.mxu0 %v185
    %285 = vmatprep.subr.mxu0 0.0
    %286 = vmatpush1.msra.mxu0 %v190
    %287 = vmatprep.subr.mxu0 0.0
    %288 = vmatpush1.msra.mxu0 %v195
    %289 = vmatprep.subr.mxu0 0.0
    %290 = vmatpush1.msra.mxu0 %v200
    %291 = vmatprep.subr.mxu0 0.0
    %292 = vmatpush1.msra.mxu0 %v205
    %293 = vmatprep.subr.mxu0 0.0
    %294 = vmatpush1.msra.mxu0 %v210
    %295 = vmatprep.subr.mxu0 0.0
    %296 = vmatpush1.msra.mxu0 %v215
    %297 = vmatprep.subr.mxu0 0.0
    %298 = vmatpush1.msra.mxu0 %v220
    %299 = vmatprep.subr.mxu0 0.0
    %300 = vmatpush1.msra.mxu0 %v225
    %301 = vmatprep.subr.mxu0 0.0
    %302 = vmatpush1.msra.mxu0 %v230
    %303 = vmatprep.subr.mxu0 0.0
    %304 = vmatpush1.msra.mxu0 %v235
    %305 = vmatprep.subr.mxu0 0.0
    %306 = vmatpush1.msra.mxu0 %v240
    %307 = vmatprep.subr.mxu0 0.0
    %308 = vmatpush1.msra.mxu0 %v245
    %309 = vmatprep.subr.mxu0 0.0
    %310 = vmatpush1.msra.mxu0 %v250
    %311 = vmatprep.subr.mxu0 0.0
    %312 = vmatpush1.msra.mxu0 %v255
    %313 = vmatprep.subr.mxu0 0.0
    %314 = vmatpush1.msra.mxu0 0.0
    %315 = vmatprep.subr.mxu0 0.0
    %316 = vmatpush1.msra.mxu0 0.0
    %317 = vmatprep.subr.mxu0 0.0
    %318 = vmatpush1.msra.mxu0 0.0
    %319 = vmatprep.subr.mxu0 0.0
    %320 = vmatpush1.msra.mxu0 0.0
    %321 = vmatprep.subr.mxu0 0.0
    %322 = vmatpush1.msra.mxu0 0.0
    %323 = vmatprep.subr.mxu0 0.0
    %324 = vmatpush1.msra.mxu0 0.0
    %325 = vmatprep.subr.mxu0 0.0
    %326 = vmatpush1.msra.mxu0 0.0
    %327 = vmatprep.subr.mxu0 0.0
    %328 = vmatpush1.msra.mxu0 0.0
    %329 = vmatprep.subr.mxu0 0.0
    %330 = vmatpush1.msra.mxu0 0.0
    %331 = vmatprep.subr.mxu0 0.0
    %332 = vmatpush1.msra.mxu0 0.0
    %333 = vmatprep.subr.mxu0 0.0
    %334 = vmatpush1.msra.mxu0 0.0
    %335 = vmatprep.subr.mxu0 0.0
    %336 = vmatpush1.msra.mxu0 0.0
    %337 = vmatprep.subr.mxu0 0.0
    %338 = vmatpush1.msra.mxu0 0.0
    %339 = vmatprep.subr.mxu0 0.0
    %340 = vmatpush1.msra.mxu0 0.0
    %341 = vmatprep.subr.mxu0 0.0
    %342 = vmatpush1.msra.mxu0 0.0
    %343 = vmatprep.subr.mxu0 0.0
    %344 = vmatpush1.msra.mxu0 0.0
    %345 = vmatprep.mubr.f32.mxu0 0.0
    %346 = vmatmul.mubr.f32.gmra.mrb[0].mxu0 %v258
    %v347 = vpop.f32.mrb[0].mxu0
    %v348 = vadd.f32 %v279, %v347
    %v349 = vpop.f32.mrb[0].mxu0
    %350 = vmatprep.mubr.f32.mxu0 0.0
    %351 = vmatmul.mubr.f32.gmra.mrb[0].mxu0 %v259
    %v352 = vpop.f32.mrb[0].mxu0
    %v353 = vadd.f32 %v279, %v352
    %v354 = vpop.f32.mrb[0].mxu0
    %355 = vmatprep.mubr.f32.mxu0 0.0
    %356 = vmatmul.mubr.f32.gmra.mrb[0].mxu0 %v260
    %v357 = vpop.f32.mrb[0].mxu0
    %v358 = vadd.f32 %v279, %v357
    %v359 = vpop.f32.mrb[0].mxu0
    %360 = vmatprep.mubr.f32.mxu0 0.0
    %361 = vmatmul.mubr.f32.gmra.mrb[0].mxu0 %v261
    %v362 = vpop.f32.mrb[0].mxu0
    %v363 = vadd.f32 %v279, %v362
    %v364 = vpop.f32.mrb[0].mxu0
    %365 = vmatprep.mubr.f32.mxu0 0.0
    %366 = vmatmul.mubr.f32.gmra.mrb[0].mxu0 %v262
    %v367 = vpop.f32.mrb[0].mxu0
    %v368 = vadd.f32 %v279, %v367
    %v369 = vpop.f32.mrb[0].mxu0
    %370 = vmatprep.mubr.f32.mxu0 0.0
    %371 = vmatmul.mubr.f32.gmra.mrb[0].mxu0 %v263
    %v372 = vpop.f32.mrb[0].mxu0
    %v373 = vadd.f32 %v279, %v372
    %v374 = vpop.f32.mrb[0].mxu0
    %375 = vmatprep.mubr.f32.mxu0 0.0
    %376 = vmatmul.mubr.f32.gmra.mrb[0].mxu0 %v264
    %v377 = vpop.f32.mrb[0].mxu0
    %v378 = vadd.f32 %v279, %v377
    %v379 = vpop.f32.mrb[0].mxu0
    %380 = vmatprep.mubr.f32.mxu0 0.0
    %381 = vmatmul.mubr.f32.gmra.mrb[0].mxu0 %v265
    %v382 = vpop.f32.mrb[0].mxu0
    %v383 = vadd.f32 %v279, %v382
    %v384 = vpop.f32.mrb[0].mxu0
    %385 = vmatprep.mubr.f32.mxu0 0.0
    %386 = vmatmul.mubr.f32.gmra.mrb[0].mxu0 %v266
    %v387 = vpop.f32.mrb[0].mxu0
    %v388 = vadd.f32 %v279, %v387
    %v389 = vpop.f32.mrb[0].mxu0
    %390 = vmatprep.mubr.f32.mxu0 0.0
    %391 = vmatmul.mubr.f32.gmra.mrb[0].mxu0 %v267
    %v392 = vpop.f32.mrb[0].mxu0
    %v393 = vadd.f32 %v279, %v392
    %v394 = vpop.f32.mrb[0].mxu0
    %395 = vmatprep.mubr.f32.mxu0 0.0
    %396 = vmatmul.mubr.f32.gmra.mrb[0].mxu0 %v268
    %v397 = vpop.f32.mrb[0].mxu0
    %v398 = vadd.f32 %v279, %v397
    %v399 = vpop.f32.mrb[0].mxu0
    %400 = vmatprep.mubr.f32.mxu0 0.0
    %401 = vmatmul.mubr.f32.gmra.mrb[0].mxu0 %v269
    %v402 = vpop.f32.mrb[0].mxu0
    %v403 = vadd.f32 %v279, %v402
    %v404 = vpop.f32.mrb[0].mxu0
    %405 = vmatprep.mubr.f32.mxu0 0.0
    %406 = vmatmul.mubr.f32.gmra.mrb[0].mxu0 %v270
    %v407 = vpop.f32.mrb[0].mxu0
    %v408 = vadd.f32 %v279, %v407
    %v409 = vpop.f32.mrb[0].mxu0
    %410 = vmatprep.mubr.f32.mxu0 0.0
    %411 = vmatmul.mubr.f32.gmra.mrb[0].mxu0 %v271
    %v412 = vpop.f32.mrb[0].mxu0
    %v413 = vadd.f32 %v279, %v412
    %v414 = vpop.f32.mrb[0].mxu0
    %415 = vmatprep.mubr.f32.mxu0 0.0
    %416 = vmatmul.mubr.f32.gmra.mrb[0].mxu0 %v272
    %v417 = vpop.f32.mrb[0].mxu0
    %v418 = vadd.f32 %v279, %v417
    %v419 = vpop.f32.mrb[0].mxu0
    %420 = vmatprep.mubr.f32.mxu0 0.0
    %421 = vmatmul.mubr.f32.gmra.mrb[0].mxu0 %v273
    %v422 = vpop.f32.mrb[0].mxu0
    %v423 = vadd.f32 %v279, %v422
    %v424 = vpop.f32.mrb[0].mxu0
    %425 = vdwg.mxu0
    %vm426 = vcmp.ge.f32.partialorder %v348, 0.0
    %vm427 = vcmp.ge.f32.partialorder %v353, 0.0
    %vm428 = vcmp.ge.f32.partialorder %v358, 0.0
    %vm429 = vcmp.ge.f32.partialorder %v363, 0.0
    %vm430 = vcmp.ge.f32.partialorder %v368, 0.0
    %vm431 = vcmp.ge.f32.partialorder %v373, 0.0
    %vm432 = vcmp.ge.f32.partialorder %v378, 0.0
    %vm433 = vcmp.ge.f32.partialorder %v383, 0.0
    %vm434 = vcmp.ge.f32.partialorder %v388, 0.0
    %vm435 = vcmp.ge.f32.partialorder %v393, 0.0
    %vm436 = vcmp.ge.f32.partialorder %v398, 0.0
    %vm437 = vcmp.ge.f32.partialorder %v403, 0.0
    %vm438 = vcmp.ge.f32.partialorder %v408, 0.0
    %vm439 = vcmp.ge.f32.partialorder %v413, 0.0
    %vm440 = vcmp.ge.f32.partialorder %v418, 0.0
    %vm441 = vcmp.ge.f32.partialorder %v423, 0.0
    %v442 = vld [vmem:[%s4] sm:$0x1]
    %v444 = vlaneseq
    %v445 = vshrl.u32 %v444, 7
    %v446 = vsub.s32 0, %v445
    %v447 = vrot.slane %v442, %v446
    %v449 = vmul.f32 %v447, %v348
    %v450 = vmul.f32 %v447, %v353
    %v451 = vmul.f32 %v447, %v358
    %v452 = vmul.f32 %v447, %v363
    %v453 = vmul.f32 %v447, %v368
    %v454 = vmul.f32 %v447, %v373
    %v455 = vmul.f32 %v447, %v378
    %v456 = vmul.f32 %v447, %v383
    %v457 = vmul.f32 %v447, %v388
    %v458 = vmul.f32 %v447, %v393
    %v459 = vmul.f32 %v447, %v398
    %v460 = vmul.f32 %v447, %v403
    %v461 = vmul.f32 %v447, %v408
    %v462 = vmul.f32 %v447, %v413
    %v463 = vmul.f32 %v447, %v418
    %v464 = vmul.f32 %v447, %v423
    %v465 = vsel %vm426, %v348, %v449
    %v466 = vsel %vm427, %v353, %v450
    %v467 = vsel %vm428, %v358, %v451
    %v468 = vsel %vm429, %v363, %v452
    %v469 = vsel %vm430, %v368, %v453
    %v470 = vsel %vm431, %v373, %v454
    %v471 = vsel %vm432, %v378, %v455
    %v472 = vsel %vm433, %v383, %v456
    %v473 = vsel %vm434, %v388, %v457
    %v474 = vsel %vm435, %v393, %v458
    %v475 = vsel %vm436, %v398, %v459
    %v476 = vsel %vm437, %v403, %v460
    %v477 = vsel %vm438, %v408, %v461
    %v478 = vsel %vm439, %v413, %v462
    %v479 = vsel %vm440, %v418, %v463
    %v480 = vsel %vm441, %v423, %v464
    %v481 = vld [vmem:[%s5] sm:$0xff]
    %v482 = vld [vmem:[%s5 + $0x8] sm:$0xff]
    %v483 = vld [vmem:[%s5 + $0x10] sm:$0xff]
    %v484 = vld [vmem:[%s5 + $0x18] sm:$0xff]
    %v485 = vld [vmem:[%s6] sm:$0x1]
    %v487 = vlaneseq
    %v488 = vshrl.u32 %v487, 7
    %v489 = vsub.s32 0, %v488
    %v490 = vrot.slane %v485, %v489
    %vm492 = vcmask 261120
    %v494 = vsel %vm492, %v465, 0
    %v497 = vsel %vm492, %v466, 0
    %v500 = vsel %vm492, %v467, 0
    %v503 = vsel %vm492, %v468, 0
    %v506 = vsel %vm492, %v469, 0
    %v509 = vsel %vm492, %v470, 0
    %v512 = vsel %vm492, %v471, 0
    %v515 = vsel %vm492, %v472, 0
    %v518 = vsel %vm492, %v473, 0
    %v521 = vsel %vm492, %v474, 0
    %v524 = vsel %vm492, %v475, 0
    %v527 = vsel %vm492, %v476, 0
    %v530 = vsel %vm492, %v477, 0
    %v533 = vsel %vm492, %v478, 0
    %v536 = vsel %vm492, %v479, 0
    %v539 = vsel %vm492, %v480, 0
    %541 = vmatprep.subr.mxu0 0.0
    %542 = vmatpush1.msra.mxu0 %v481
    %543 = vmatprep.subr.mxu0 0.0
    %544 = vmatpush1.msra.mxu0 %v482
    %545 = vmatprep.subr.mxu0 0.0
    %546 = vmatpush1.msra.mxu0 %v483
    %547 = vmatprep.subr.mxu0 0.0
    %548 = vmatpush1.msra.mxu0 %v484
    %549 = vmatprep.subr.mxu0 0.0
    %550 = vmatpush1.msra.mxu0 0.0
    %551 = vmatprep.subr.mxu0 0.0
    %552 = vmatpush1.msra.mxu0 0.0
    %553 = vmatprep.subr.mxu0 0.0
    %554 = vmatpush1.msra.mxu0 0.0
    %555 = vmatprep.subr.mxu0 0.0
    %556 = vmatpush1.msra.mxu0 0.0
    %557 = vmatprep.subr.mxu0 0.0
    %558 = vmatpush1.msra.mxu0 0.0
    %559 = vmatprep.subr.mxu0 0.0
    %560 = vmatpush1.msra.mxu0 0.0
    %561 = vmatprep.subr.mxu0 0.0
    %562 = vmatpush1.msra.mxu0 0.0
    %563 = vmatprep.subr.mxu0 0.0
    %564 = vmatpush1.msra.mxu0 0.0
    %565 = vmatprep.subr.mxu0 0.0
    %566 = vmatpush1.msra.mxu0 0.0
    %567 = vmatprep.subr.mxu0 0.0
    %568 = vmatpush1.msra.mxu0 0.0
    %569 = vmatprep.subr.mxu0 0.0
    %570 = vmatpush1.msra.mxu0 0.0
    %571 = vmatprep.subr.mxu0 0.0
    %572 = vmatpush1.msra.mxu0 0.0
    %573 = vmatprep.subr.mxu0 0.0
    %574 = vmatpush1.msra.mxu0 0.0
    %575 = vmatprep.subr.mxu0 0.0
    %576 = vmatpush1.msra.mxu0 0.0
    %577 = vmatprep.subr.mxu0 0.0
    %578 = vmatpush1.msra.mxu0 0.0
    %579 = vmatprep.subr.mxu0 0.0
    %580 = vmatpush1.msra.mxu0 0.0
    %581 = vmatprep.subr.mxu0 0.0
    %582 = vmatpush1.msra.mxu0 0.0
    %583 = vmatprep.subr.mxu0 0.0
    %584 = vmatpush1.msra.mxu0 0.0
    %585 = vmatprep.subr.mxu0 0.0
    %586 = vmatpush1.msra.mxu0 0.0
    %587 = vmatprep.subr.mxu0 0.0
    %588 = vmatpush1.msra.mxu0 0.0
    %589 = vmatprep.subr.mxu0 0.0
    %590 = vmatpush1.msra.mxu0 0.0
    %591 = vmatprep.subr.mxu0 0.0
    %592 = vmatpush1.msra.mxu0 0.0
    %593 = vmatprep.subr.mxu0 0.0
    %594 = vmatpush1.msra.mxu0 0.0
    %595 = vmatprep.subr.mxu0 0.0
    %596 = vmatpush1.msra.mxu0 0.0
    %597 = vmatprep.subr.mxu0 0.0
    %598 = vmatpush1.msra.mxu0 0.0
    %599 = vmatprep.subr.mxu0 0.0
    %600 = vmatpush1.msra.mxu0 0.0
    %601 = vmatprep.subr.mxu0 0.0
    %602 = vmatpush1.msra.mxu0 0.0
    %603 = vmatprep.subr.mxu0 0.0
    %604 = vmatpush1.msra.mxu0 0.0
    %605 = vmatprep.mubr.f32.mxu0 0.0
    %606 = vmatmul.mubr.f32.gmra.mrb[0].mxu0 %v494
    %v607 = vpop.f32.mrb[0].mxu0
    %v608 = vadd.f32 %v490, %v607
    %v609 = vpop.f32.mrb[0].mxu0
    %610 = vmatprep.mubr.f32.mxu0 0.0
    %611 = vmatmul.mubr.f32.gmra.mrb[0].mxu0 %v497
    %v612 = vpop.f32.mrb[0].mxu0
    %v613 = vadd.f32 %v490, %v612
    %v614 = vpop.f32.mrb[0].mxu0
    %615 = vmatprep.mubr.f32.mxu0 0.0
    %616 = vmatmul.mubr.f32.gmra.mrb[0].mxu0 %v500
    %v617 = vpop.f32.mrb[0].mxu0
    %v618 = vadd.f32 %v490, %v617
    %v619 = vpop.f32.mrb[0].mxu0
    %620 = vmatprep.mubr.f32.mxu0 0.0
    %621 = vmatmul.mubr.f32.gmra.mrb[0].mxu0 %v503
    %v622 = vpop.f32.mrb[0].mxu0
    %v623 = vadd.f32 %v490, %v622
    %v624 = vpop.f32.mrb[0].mxu0
    %625 = vmatprep.mubr.f32.mxu0 0.0
    %626 = vmatmul.mubr.f32.gmra.mrb[0].mxu0 %v506
    %v627 = vpop.f32.mrb[0].mxu0
    %v628 = vadd.f32 %v490, %v627
    %v629 = vpop.f32.mrb[0].mxu0
    %630 = vmatprep.mubr.f32.mxu0 0.0
    %631 = vmatmul.mubr.f32.gmra.mrb[0].mxu0 %v509
    %v632 = vpop.f32.mrb[0].mxu0
    %v633 = vadd.f32 %v490, %v632
    %v634 = vpop.f32.mrb[0].mxu0
    %635 = vmatprep.mubr.f32.mxu0 0.0
    %636 = vmatmul.mubr.f32.gmra.mrb[0].mxu0 %v512
    %v637 = vpop.f32.mrb[0].mxu0
    %v638 = vadd.f32 %v490, %v637
    %v639 = vpop.f32.mrb[0].mxu0
    %640 = vmatprep.mubr.f32.mxu0 0.0
    %641 = vmatmul.mubr.f32.gmra.mrb[0].mxu0 %v515
    %v642 = vpop.f32.mrb[0].mxu0
    %v643 = vadd.f32 %v490, %v642
    %v644 = vpop.f32.mrb[0].mxu0
    %645 = vmatprep.mubr.f32.mxu0 0.0
    %646 = vmatmul.mubr.f32.gmra.mrb[0].mxu0 %v518
    %v647 = vpop.f32.mrb[0].mxu0
    %v648 = vadd.f32 %v490, %v647
    %v649 = vpop.f32.mrb[0].mxu0
    %650 = vmatprep.mubr.f32.mxu0 0.0
    %651 = vmatmul.mubr.f32.gmra.mrb[0].mxu0 %v521
    %v652 = vpop.f32.mrb[0].mxu0
    %v653 = vadd.f32 %v490, %v652
    %v654 = vpop.f32.mrb[0].mxu0
    %655 = vmatprep.mubr.f32.mxu0 0.0
    %656 = vmatmul.mubr.f32.gmra.mrb[0].mxu0 %v524
    %v657 = vpop.f32.mrb[0].mxu0
    %v658 = vadd.f32 %v490, %v657
    %v659 = vpop.f32.mrb[0].mxu0
    %660 = vmatprep.mubr.f32.mxu0 0.0
    %661 = vmatmul.mubr.f32.gmra.mrb[0].mxu0 %v527
    %v662 = vpop.f32.mrb[0].mxu0
    %v663 = vadd.f32 %v490, %v662
    %v664 = vpop.f32.mrb[0].mxu0
    %665 = vmatprep.mubr.f32.mxu0 0.0
    %666 = vmatmul.mubr.f32.gmra.mrb[0].mxu0 %v530
    %v667 = vpop.f32.mrb[0].mxu0
    %v668 = vadd.f32 %v490, %v667
    %v669 = vpop.f32.mrb[0].mxu0
    %670 = vmatprep.mubr.f32.mxu0 0.0
    %671 = vmatmul.mubr.f32.gmra.mrb[0].mxu0 %v533
    %v672 = vpop.f32.mrb[0].mxu0
    %v673 = vadd.f32 %v490, %v672
    %v674 = vpop.f32.mrb[0].mxu0
    %675 = vmatprep.mubr.f32.mxu0 0.0
    %676 = vmatmul.mubr.f32.gmra.mrb[0].mxu0 %v536
    %v677 = vpop.f32.mrb[0].mxu0
    %v678 = vadd.f32 %v490, %v677
    %v679 = vpop.f32.mrb[0].mxu0
    %680 = vmatprep.mubr.f32.mxu0 0.0
    %681 = vmatmul.mubr.f32.gmra.mrb[0].mxu0 %v539
    %v682 = vpop.f32.mrb[0].mxu0
    %v683 = vadd.f32 %v490, %v682
    %v684 = vpop.f32.mrb[0].mxu0
    %685 = vdwg.mxu0
    %v686 = vsel %vm492, %v608, 0.0
    %v687 = vsel %vm492, %v613, 0.0
    %v688 = vadd.f32 %v686, %v687
    %v689 = vsel %vm492, %v618, 0.0
    %v690 = vadd.f32 %v688, %v689
    %v691 = vsel %vm492, %v623, 0.0
    %v692 = vadd.f32 %v690, %v691
    %v693 = vsel %vm492, %v628, 0.0
    %v694 = vadd.f32 %v692, %v693
    %v695 = vsel %vm492, %v633, 0.0
    %v696 = vadd.f32 %v694, %v695
    %v697 = vsel %vm492, %v638, 0.0
    %v698 = vadd.f32 %v696, %v697
    %v699 = vsel %vm492, %v643, 0.0
    %v700 = vadd.f32 %v698, %v699
    %v701 = vsel %vm492, %v648, 0.0
    %v702 = vadd.f32 %v700, %v701
    %v703 = vsel %vm492, %v653, 0.0
    %v704 = vadd.f32 %v702, %v703
    %v705 = vsel %vm492, %v658, 0.0
    %v706 = vadd.f32 %v704, %v705
    %v707 = vsel %vm492, %v663, 0.0
    %v708 = vadd.f32 %v706, %v707
    %v709 = vsel %vm492, %v668, 0.0
    %v710 = vadd.f32 %v708, %v709
    %v711 = vsel %vm492, %v673, 0.0
    %v712 = vadd.f32 %v710, %v711
    %v713 = vsel %vm492, %v678, 0.0
    %v714 = vadd.f32 %v712, %v713
    %v715 = vsel %vm492, %v683, 0.0
    %v716 = vadd.f32 %v714, %v715
    %v717 = vrot.slane %v716, 4
    %v718 = vadd.f32 %v716, %v717
    %v719 = vrot.slane %v718, 2
    %v720 = vadd.f32 %v718, %v719
    %v721 = vrot.slane %v720, 1
    %v722 = vadd.f32 %v720, %v721
    %v723 = vrcp.pop 128.0
    %v724 = vmul.f32 %v722, %v723
    %v725 = vsub.f32 %v608, %v724
    %v726 = vsub.f32 %v613, %v724
    %v727 = vsub.f32 %v618, %v724
    %v728 = vsub.f32 %v623, %v724
    %v729 = vsub.f32 %v628, %v724
    %v730 = vsub.f32 %v633, %v724
    %v731 = vsub.f32 %v638, %v724
    %v732 = vsub.f32 %v643, %v724
    %v733 = vsub.f32 %v648, %v724
    %v734 = vsub.f32 %v653, %v724
    %v735 = vsub.f32 %v658, %v724
    %v736 = vsub.f32 %v663, %v724
    %v737 = vsub.f32 %v668, %v724
    %v738 = vsub.f32 %v673, %v724
    %v739 = vsub.f32 %v678, %v724
    %v740 = vsub.f32 %v683, %v724
    %v741 = vmul.f32 %v725, %v725
    %v742 = vmul.f32 %v726, %v726
    %v743 = vmul.f32 %v727, %v727
    %v744 = vmul.f32 %v728, %v728
    %v745 = vmul.f32 %v729, %v729
    %v746 = vmul.f32 %v730, %v730
    %v747 = vmul.f32 %v731, %v731
    %v748 = vmul.f32 %v732, %v732
    %v749 = vmul.f32 %v733, %v733
    %v750 = vmul.f32 %v734, %v734
    %v751 = vmul.f32 %v735, %v735
    %v752 = vmul.f32 %v736, %v736
    %v753 = vmul.f32 %v737, %v737
    %v754 = vmul.f32 %v738, %v738
    %v755 = vmul.f32 %v739, %v739
    %v756 = vmul.f32 %v740, %v740
    %v757 = vsel %vm492, %v741, 0.0
    %v758 = vsel %vm492, %v742, 0.0
    %v759 = vadd.f32 %v757, %v758
    %v760 = vsel %vm492, %v743, 0.0
    %v761 = vadd.f32 %v759, %v760
    %v762 = vsel %vm492, %v744, 0.0
    %v763 = vadd.f32 %v761, %v762
    %v764 = vsel %vm492, %v745, 0.0
    %v765 = vadd.f32 %v763, %v764
    %v766 = vsel %vm492, %v746, 0.0
    %v767 = vadd.f32 %v765, %v766
    %v768 = vsel %vm492, %v747, 0.0
    %v769 = vadd.f32 %v767, %v768
    %v770 = vsel %vm492, %v748, 0.0
    %v771 = vadd.f32 %v769, %v770
    %v772 = vsel %vm492, %v749, 0.0
    %v773 = vadd.f32 %v771, %v772
    %v774 = vsel %vm492, %v750, 0.0
    %v775 = vadd.f32 %v773, %v774
    %v776 = vsel %vm492, %v751, 0.0
    %v777 = vadd.f32 %v775, %v776
    %v778 = vsel %vm492, %v752, 0.0
    %v779 = vadd.f32 %v777, %v778
    %v780 = vsel %vm492, %v753, 0.0
    %v781 = vadd.f32 %v779, %v780
    %v782 = vsel %vm492, %v754, 0.0
    %v783 = vadd.f32 %v781, %v782
    %v784 = vsel %vm492, %v755, 0.0
    %v785 = vadd.f32 %v783, %v784
    %v786 = vsel %vm492, %v756, 0.0
    %v787 = vadd.f32 %v785, %v786
    %v788 = vrot.slane %v787, 4
    %v789 = vadd.f32 %v787, %v788
    %v790 = vrot.slane %v789, 2
    %v791 = vadd.f32 %v789, %v790
    %v792 = vrot.slane %v791, 1
    %v793 = vadd.f32 %v791, %v792
    %v794 = vmul.f32 %v793, %v723
    %v795 = vadd.f32 %v794, 1e-05
    %v796 = vrsqrt.pop %v795
    %v797 = vmul.f32 %v725, %v796
    %v798 = vmul.f32 %v726, %v796
    %v799 = vmul.f32 %v727, %v796
    %v800 = vmul.f32 %v728, %v796
    %v801 = vmul.f32 %v729, %v796
    %v802 = vmul.f32 %v730, %v796
    %v803 = vmul.f32 %v731, %v796
    %v804 = vmul.f32 %v732, %v796
    %v805 = vmul.f32 %v733, %v796
    %v806 = vmul.f32 %v734, %v796
    %v807 = vmul.f32 %v735, %v796
    %v808 = vmul.f32 %v736, %v796
    %v809 = vmul.f32 %v737, %v796
    %v810 = vmul.f32 %v738, %v796
    %v811 = vmul.f32 %v739, %v796
    %v812 = vmul.f32 %v740, %v796
    %v813 = vld [vmem:[%s7] sm:$0x1]
    %v815 = vlaneseq
    %v816 = vshrl.u32 %v815, 7
    %v817 = vsub.s32 0, %v816
    %v818 = vrot.slane %v813, %v817
    %v820 = vmul.f32 %v797, %v818
    %v821 = vmul.f32 %v798, %v818
    %v822 = vmul.f32 %v799, %v818
    %v823 = vmul.f32 %v800, %v818
    %v824 = vmul.f32 %v801, %v818
    %v825 = vmul.f32 %v802, %v818
    %v826 = vmul.f32 %v803, %v818
    %v827 = vmul.f32 %v804, %v818
    %v828 = vmul.f32 %v805, %v818
    %v829 = vmul.f32 %v806, %v818
    %v830 = vmul.f32 %v807, %v818
    %v831 = vmul.f32 %v808, %v818
    %v832 = vmul.f32 %v809, %v818
    %v833 = vmul.f32 %v810, %v818
    %v834 = vmul.f32 %v811, %v818
    %v835 = vmul.f32 %v812, %v818
    %v836 = vld [vmem:[%s8] sm:$0x1]
    %v838 = vlaneseq
    %v839 = vshrl.u32 %v838, 7
    %v840 = vsub.s32 0, %v839
    %v841 = vrot.slane %v836, %v840
    %v843 = vadd.f32 %v820, %v841
    %v844 = vadd.f32 %v821, %v841
    %v845 = vadd.f32 %v822, %v841
    %v846 = vadd.f32 %v823, %v841
    %v847 = vadd.f32 %v824, %v841
    %v848 = vadd.f32 %v825, %v841
    %v849 = vadd.f32 %v826, %v841
    %v850 = vadd.f32 %v827, %v841
    %v851 = vadd.f32 %v828, %v841
    %v852 = vadd.f32 %v829, %v841
    %v853 = vadd.f32 %v830, %v841
    %v854 = vadd.f32 %v831, %v841
    %v855 = vadd.f32 %v832, %v841
    %v856 = vadd.f32 %v833, %v841
    %v857 = vadd.f32 %v834, %v841
    %v858 = vadd.f32 %v835, %v841
    %s859 = sld [smem:[#allocation2]]
    %vm860 = vcmp.ge.f32.partialorder %v843, 0.0
    %vm861 = vcmp.ge.f32.partialorder %v844, 0.0
    %vm862 = vcmp.ge.f32.partialorder %v845, 0.0
    %vm863 = vcmp.ge.f32.partialorder %v846, 0.0
    %vm864 = vcmp.ge.f32.partialorder %v847, 0.0
    %vm865 = vcmp.ge.f32.partialorder %v848, 0.0
    %vm866 = vcmp.ge.f32.partialorder %v849, 0.0
    %vm867 = vcmp.ge.f32.partialorder %v850, 0.0
    %vm868 = vcmp.ge.f32.partialorder %v851, 0.0
    %vm869 = vcmp.ge.f32.partialorder %v852, 0.0
    %vm870 = vcmp.ge.f32.partialorder %v853, 0.0
    %vm871 = vcmp.ge.f32.partialorder %v854, 0.0
    %vm872 = vcmp.ge.f32.partialorder %v855, 0.0
    %vm873 = vcmp.ge.f32.partialorder %v856, 0.0
    %vm874 = vcmp.ge.f32.partialorder %v857, 0.0
    %vm875 = vcmp.ge.f32.partialorder %v858, 0.0
    %v876 = vstv %s859
    %v877 = vmul.f32 %v876, %v843
    %v878 = vmul.f32 %v876, %v844
    %v879 = vmul.f32 %v876, %v845
    %v880 = vmul.f32 %v876, %v846
    %v881 = vmul.f32 %v876, %v847
    %v882 = vmul.f32 %v876, %v848
    %v883 = vmul.f32 %v876, %v849
    %v884 = vmul.f32 %v876, %v850
    %v885 = vmul.f32 %v876, %v851
    %v886 = vmul.f32 %v876, %v852
    %v887 = vmul.f32 %v876, %v853
    %v888 = vmul.f32 %v876, %v854
    %v889 = vmul.f32 %v876, %v855
    %v890 = vmul.f32 %v876, %v856
    %v891 = vmul.f32 %v876, %v857
    %v892 = vmul.f32 %v876, %v858
    %v893 = vsel %vm860, %v843, %v877
    %v894 = vsel %vm861, %v844, %v878
    %v895 = vsel %vm862, %v845, %v879
    %v896 = vsel %vm863, %v846, %v880
    %v897 = vsel %vm864, %v847, %v881
    %v898 = vsel %vm865, %v848, %v882
    %v899 = vsel %vm866, %v849, %v883
    %v900 = vsel %vm867, %v850, %v884
    %v901 = vsel %vm868, %v851, %v885
    %v902 = vsel %vm869, %v852, %v886
    %v903 = vsel %vm870, %v853, %v887
    %v904 = vsel %vm871, %v854, %v888
    %v905 = vsel %vm872, %v855, %v889
    %v906 = vsel %vm873, %v856, %v890
    %v907 = vsel %vm874, %v857, %v891
    %v908 = vsel %vm875, %v858, %v892
    %v909 = vld [vmem:[%s9] sm:$0xff]
    %v910 = vld [vmem:[%s9 + $0x8] sm:$0xff]
    %v911 = vld [vmem:[%s9 + $0x10] sm:$0xff]
    %v912 = vld [vmem:[%s9 + $0x18] sm:$0xff]
    %v913 = vld [vmem:[%s9 + $0x20] sm:$0xff]
    %v914 = vld [vmem:[%s9 + $0x28] sm:$0xff]
    %v915 = vld [vmem:[%s9 + $0x30] sm:$0xff]
    %v916 = vld [vmem:[%s9 + $0x38] sm:$0xff]
    %v917 = vld [vmem:[%s9 + $0x40] sm:$0xff]
    %v918 = vld [vmem:[%s9 + $0x48] sm:$0xff]
    %v919 = vld [vmem:[%s9 + $0x50] sm:$0xff]
    %v920 = vld [vmem:[%s9 + $0x58] sm:$0xff]
    %v921 = vld [vmem:[%s9 + $0x60] sm:$0xff]
    %v922 = vld [vmem:[%s9 + $0x68] sm:$0xff]
    %v923 = vld [vmem:[%s9 + $0x70] sm:$0xff]
    %v924 = vld [vmem:[%s9 + $0x78] sm:$0xff]
    %vm925 = vcmp.ge.u32.totalorder %v909, 858993459
    %vm926 = vcmp.ge.u32.totalorder %v910, 858993459
    %vm927 = vcmp.ge.u32.totalorder %v911, 858993459
    %vm928 = vcmp.ge.u32.totalorder %v912, 858993459
    %vm929 = vcmp.ge.u32.totalorder %v913, 858993459
    %vm930 = vcmp.ge.u32.totalorder %v914, 858993459
    %vm931 = vcmp.ge.u32.totalorder %v915, 858993459
    %vm932 = vcmp.ge.u32.totalorder %v916, 858993459
    %vm933 = vcmp.ge.u32.totalorder %v917, 858993459
    %vm934 = vcmp.ge.u32.totalorder %v918, 858993459
    %vm935 = vcmp.ge.u32.totalorder %v919, 858993459
    %vm936 = vcmp.ge.u32.totalorder %v920, 858993459
    %vm937 = vcmp.ge.u32.totalorder %v921, 858993459
    %vm938 = vcmp.ge.u32.totalorder %v922, 858993459
    %vm939 = vcmp.ge.u32.totalorder %v923, 858993459
    %vm940 = vcmp.ge.u32.totalorder %v924, 858993459
    %957 = vrot.lane.b32.xlu0 %v893, 32
    %v958 = vpop.permute.xlu0 %957
    %959 = vrot.lane.b32.xlu0 %v894, 32
    %v960 = vpop.permute.xlu0 %959
    %961 = vrot.lane.b32.xlu0 %v895, 32
    %v962 = vpop.permute.xlu0 %961
    %963 = vrot.lane.b32.xlu0 %v896, 32
    %v964 = vpop.permute.xlu0 %963
    %965 = vrot.lane.b32.xlu0 %v897, 32
    %v966 = vpop.permute.xlu0 %965
    %967 = vrot.lane.b32.xlu0 %v898, 32
    %v968 = vpop.permute.xlu0 %967
    %969 = vrot.lane.b32.xlu0 %v899, 32
    %v970 = vpop.permute.xlu0 %969
    %971 = vrot.lane.b32.xlu0 %v900, 32
    %v972 = vpop.permute.xlu0 %971
    %973 = vrot.lane.b32.xlu0 %v901, 32
    %v974 = vpop.permute.xlu0 %973
    %975 = vrot.lane.b32.xlu0 %v902, 32
    %v976 = vpop.permute.xlu0 %975
    %977 = vrot.lane.b32.xlu0 %v903, 32
    %v978 = vpop.permute.xlu0 %977
    %979 = vrot.lane.b32.xlu0 %v904, 32
    %v980 = vpop.permute.xlu0 %979
    %981 = vrot.lane.b32.xlu0 %v905, 32
    %v982 = vpop.permute.xlu0 %981
    %983 = vrot.lane.b32.xlu0 %v906, 32
    %v984 = vpop.permute.xlu0 %983
    %985 = vrot.lane.b32.xlu0 %v907, 32
    %v986 = vpop.permute.xlu0 %985
    %987 = vrot.lane.b32.xlu0 %v908, 32
    %v988 = vpop.permute.xlu0 %987
    %v1005 = vsel %vm492, %v893, %v958
    %v1006 = vsel %vm492, %v894, %v960
    %v1007 = vsel %vm492, %v895, %v962
    %v1008 = vsel %vm492, %v896, %v964
    %v1009 = vsel %vm492, %v897, %v966
    %v1010 = vsel %vm492, %v898, %v968
    %v1011 = vsel %vm492, %v899, %v970
    %v1012 = vsel %vm492, %v900, %v972
    %v1013 = vsel %vm492, %v901, %v974
    %v1014 = vsel %vm492, %v902, %v976
    %v1015 = vsel %vm492, %v903, %v978
    %v1016 = vsel %vm492, %v904, %v980
    %v1017 = vsel %vm492, %v905, %v982
    %v1018 = vsel %vm492, %v906, %v984
    %v1019 = vsel %vm492, %v907, %v986
    %v1020 = vsel %vm492, %v908, %v988
    %v1021 = vmul.f32 %v1005, 1.25
    %v1022 = vmul.f32 %v1006, 1.25
    %v1023 = vmul.f32 %v1007, 1.25
    %v1024 = vmul.f32 %v1008, 1.25
    %v1025 = vmul.f32 %v1009, 1.25
    %v1026 = vmul.f32 %v1010, 1.25
    %v1027 = vmul.f32 %v1011, 1.25
    %v1028 = vmul.f32 %v1012, 1.25
    %v1029 = vmul.f32 %v1013, 1.25
    %v1030 = vmul.f32 %v1014, 1.25
    %v1031 = vmul.f32 %v1015, 1.25
    %v1032 = vmul.f32 %v1016, 1.25
    %v1033 = vmul.f32 %v1017, 1.25
    %v1034 = vmul.f32 %v1018, 1.25
    %v1035 = vmul.f32 %v1019, 1.25
    %v1036 = vmul.f32 %v1020, 1.25
    %v1037 = vsel %vm925, %v1021, 0.0
    %v1038 = vsel %vm926, %v1022, 0.0
    %v1039 = vsel %vm927, %v1023, 0.0
    %v1040 = vsel %vm928, %v1024, 0.0
    %v1041 = vsel %vm929, %v1025, 0.0
    %v1042 = vsel %vm930, %v1026, 0.0
    %v1043 = vsel %vm931, %v1027, 0.0
    %v1044 = vsel %vm932, %v1028, 0.0
    %v1045 = vsel %vm933, %v1029, 0.0
    %v1046 = vsel %vm934, %v1030, 0.0
    %v1047 = vsel %vm935, %v1031, 0.0
    %v1048 = vsel %vm936, %v1032, 0.0
    %v1049 = vsel %vm937, %v1033, 0.0
    %v1050 = vsel %vm938, %v1034, 0.0
    %v1051 = vsel %vm939, %v1035, 0.0
    %v1052 = vsel %vm940, %v1036, 0.0
    %1069 = vrot.lane.b32.xlu0 %v1037, 64
    %v1070 = vpop.permute.xlu0 %1069
    %1071 = vrot.lane.b32.xlu0 %v1038, 64
    %v1072 = vpop.permute.xlu0 %1071
    %1073 = vrot.lane.b32.xlu0 %v1039, 64
    %v1074 = vpop.permute.xlu0 %1073
    %1075 = vrot.lane.b32.xlu0 %v1040, 64
    %v1076 = vpop.permute.xlu0 %1075
    %1077 = vrot.lane.b32.xlu0 %v1041, 64
    %v1078 = vpop.permute.xlu0 %1077
    %1079 = vrot.lane.b32.xlu0 %v1042, 64
    %v1080 = vpop.permute.xlu0 %1079
    %1081 = vrot.lane.b32.xlu0 %v1043, 64
    %v1082 = vpop.permute.xlu0 %1081
    %1083 = vrot.lane.b32.xlu0 %v1044, 64
    %v1084 = vpop.permute.xlu0 %1083
    %1085 = vrot.lane.b32.xlu0 %v1045, 64
    %v1086 = vpop.permute.xlu0 %1085
    %1087 = vrot.lane.b32.xlu0 %v1046, 64
    %v1088 = vpop.permute.xlu0 %1087
    %1089 = vrot.lane.b32.xlu0 %v1047, 64
    %v1090 = vpop.permute.xlu0 %1089
    %1091 = vrot.lane.b32.xlu0 %v1048, 64
    %v1092 = vpop.permute.xlu0 %1091
    %1093 = vrot.lane.b32.xlu0 %v1049, 64
    %v1094 = vpop.permute.xlu0 %1093
    %1095 = vrot.lane.b32.xlu0 %v1050, 64
    %v1096 = vpop.permute.xlu0 %1095
    %1097 = vrot.lane.b32.xlu0 %v1051, 64
    %v1098 = vpop.permute.xlu0 %1097
    %1099 = vrot.lane.b32.xlu0 %v1052, 64
    %v1100 = vpop.permute.xlu0 %1099
    %v1117 = vsel %vm64, %v465, %v1070
    %v1118 = vsel %vm64, %v466, %v1072
    %v1119 = vsel %vm64, %v467, %v1074
    %v1120 = vsel %vm64, %v468, %v1076
    %v1121 = vsel %vm64, %v469, %v1078
    %v1122 = vsel %vm64, %v470, %v1080
    %v1123 = vsel %vm64, %v471, %v1082
    %v1124 = vsel %vm64, %v472, %v1084
    %v1125 = vsel %vm64, %v473, %v1086
    %v1126 = vsel %vm64, %v474, %v1088
    %v1127 = vsel %vm64, %v475, %v1090
    %v1128 = vsel %vm64, %v476, %v1092
    %v1129 = vsel %vm64, %v477, %v1094
    %v1130 = vsel %vm64, %v478, %v1096
    %v1131 = vsel %vm64, %v479, %v1098
    %v1132 = vsel %vm64, %v480, %v1100
    %1133 = vst [vmem:[#allocation3] sm:$0xff] %v1117
    %1134 = vst [vmem:[#allocation3 + $0x8] sm:$0xff] %v1118
    %1135 = vst [vmem:[#allocation3 + $0x10] sm:$0xff] %v1119
    %1136 = vst [vmem:[#allocation3 + $0x18] sm:$0xff] %v1120
    %1137 = vst [vmem:[#allocation3 + $0x20] sm:$0xff] %v1121
    %1138 = vst [vmem:[#allocation3 + $0x28] sm:$0xff] %v1122
    %1139 = vst [vmem:[#allocation3 + $0x30] sm:$0xff] %v1123
    %1140 = vst [vmem:[#allocation3 + $0x38] sm:$0xff] %v1124
    %1141 = vst [vmem:[#allocation3 + $0x40] sm:$0xff] %v1125
    %1142 = vst [vmem:[#allocation3 + $0x48] sm:$0xff] %v1126
    %1143 = vst [vmem:[#allocation3 + $0x50] sm:$0xff] %v1127
    %1144 = vst [vmem:[#allocation3 + $0x58] sm:$0xff] %v1128
    %1145 = vst [vmem:[#allocation3 + $0x60] sm:$0xff] %v1129
    %1146 = vst [vmem:[#allocation3 + $0x68] sm:$0xff] %v1130
    %1147 = vst [vmem:[#allocation3 + $0x70] sm:$0xff] %v1131
    %1148 = vst [vmem:[#allocation3 + $0x78] sm:$0xff] %v1132
    // Predicated region
    $region46: #{tpu_custom_call.1} parent=1 // pred_check
      _
    $region47: #{tpu_custom_call.1} parent=1 // pred_check_branch
      %1150 = sbr.rel (0) target = $region49
    $region48: #{tpu_custom_call.1} parent=1 // pred_region
      %s1152 = ssub.s32 2048, 2048
      %1153 = vsyncadd [#allocation4], %s1152
      %s1154 = sshll.u32 [#allocation3], 4
      %s1155 = int_to_ptr.vmem [resolvable:$true] %s1154
      %1160 = dma.vmem_to_hbm [thread:$0]  %s1155, 2048, %s11, [#allocation4], 128, 128, 8
    $region49: #{tpu_custom_call.1} parent=1 // pred_fallthru
      _
    // Predicated region
    $region50: #{tpu_custom_call.1} parent=1 // pred_check
      _
    $region51: #{tpu_custom_call.1} parent=1 // pred_check_branch
      %1162 = sbr.rel (0) target = $region53
    $region52: #{tpu_custom_call.1} parent=1 // pred_region
      %1163 = dma.done [#allocation4], 2048
    $region53: #{tpu_custom_call.1} parent=1 // pred_fallthru
      _
    %1164 = vsyncpa [#allocation4], 1

</llo_original>
